<compile_context>
chip_gen: v7x
topology: tpu7x:2x2x1
jax: 0.10.0
libtpu: 0.0.40
codegen_flags: <defaults>
</compile_context>

<pallas_src>
import jax
import jax.numpy as jnp
from jax.experimental import pallas as pl
from jax.experimental.pallas import tpu as pltpu

_LANE = 128


def _round_up(x, m):
    return (x + m - 1) // m * m


def _device_kind():
    try:
        return jax.devices()[0].device_kind.lower()
    except Exception:
        return ""


def _epilogue_dtype(kind):
    # bf16 VPU epilogue on v6e / v7x; f32 elsewhere (v5e has no bf16 VPU).
    if ("v6" in kind) or ("v7" in kind) or ("7x" in kind):
        return jnp.bfloat16
    return jnp.float32


def _choose_batch_tile(B, kind):
    """MXU-friendly batch tile, per TPU generation.

    Small B -> one grid step.  Large B -> big tiles on 1-TC chips (v5e/v6e);
    on v7x keep >= 4 grid steps so each of the 2 TensorCores pipelines >= 2
    tiles (DMA/compute overlap) instead of getting a single exposed tile.
    """
    if B <= 128:
        return _round_up(B, 16)            # 16 = bf16 sublane pack
    if ("v7" in kind) or ("7x" in kind):
        steps = max(4, pl.cdiv(B, 512))    # >= 2 tiles per TensorCore
    elif "v5" in kind:
        steps = pl.cdiv(B, 512)            # 128-row MXU: modest tiles suffice
    else:                                  # v6e / unknown single-TC default
        steps = pl.cdiv(B, 1024)
    if steps <= 1:
        return _round_up(B, 16)
    return _round_up(pl.cdiv(B, steps), 128)


def critic_forward(state, action, params, *, batch_tile=None):
    """Pallas forward pass of CriticNetwork (use_batch_norm=False path)."""
    B, S = state.shape
    _, A = action.shape
    w1, b1, w2h, w2a, b2, w3, b3, w4, b4 = params
    FC1, FC2, FC3 = w1.shape[1], w2h.shape[1], w3.shape[1]

    kind = _device_kind()
    ep_dtype = _epilogue_dtype(kind)

    if batch_tile is None:
        batch_tile = _choose_batch_tile(B, kind)
    batch_tile = max(16, _round_up(int(batch_tile), 16))

    # Pad the batch so every tile is full; slice the padding off afterwards.
    B_pad = _round_up(B, batch_tile)
    if B_pad != B:
        pad = B_pad - B
        state = jnp.pad(state, ((0, pad), (0, 0)))
        action = jnp.pad(action, ((0, pad), (0, 0)))

    # bf16 streamed inputs + bf16 MXU operands (accumulation stays f32).
    state_bf = state.astype(jnp.bfloat16)
    action_bf = action.astype(jnp.bfloat16)
    w1_bf = w1.astype(jnp.bfloat16)
    w2h_bf = w2h.astype(jnp.bfloat16)
    w2a_bf = w2a.astype(jnp.bfloat16)
    w3_bf = w3.astype(jnp.bfloat16)
    # fc4 runs on the VPU/XLU in f32: keep its weight as a (1, FC3) f32 row.
    w4_row = w4.reshape(1, FC3).astype(jnp.float32)

    # Pack biases into one f32 row with 128-lane-aligned segment offsets:
    # [b1 | pad | b2 | pad | b3 | pad | b4 | pad].
    a1, a2, a3 = (_round_up(FC1, _LANE), _round_up(FC2, _LANE),
                  _round_up(FC3, _LANE))
    off1, off2, off3, off4 = 0, a1, a1 + a2, a1 + a2 + a3

    def _pad_row(b, n, width):
        return jnp.pad(b.reshape(1, n).astype(jnp.float32),
                       ((0, 0), (0, width - n)))

    b_all = jnp.concatenate(
        [_pad_row(b1, FC1, a1), _pad_row(b2, FC2, a2), _pad_row(b3, FC3, a3),
         _pad_row(b4, 1, _LANE)], axis=1)

    def kernel(s_ref, a_ref, w1_ref, w2h_ref, w2a_ref, w3_ref, w4_ref, b_ref,
               q_ref):
        # F.leaky_relu default slope 0.01; max-form (no compare+select).
        leaky = lambda x: jnp.maximum(x, 0.01 * x)

        s = s_ref[...]                       # already bf16
        a = a_ref[...]

        # Biases: tiny (1, FC) casts to the epilogue dtype (no-op when f32).
        bias1 = b_ref[:, off1:off1 + FC1].astype(ep_dtype)
        bias2 = b_ref[:, off2:off2 + FC2].astype(ep_dtype)
        bias3 = b_ref[:, off3:off3 + FC3].astype(ep_dtype)
        bias4 = b_ref[:, off4:off4 + 1]      # f32

        # x = leaky_relu(fc1(state))
        h1 = leaky(jnp.dot(s, w1_ref[...],
                           preferred_element_type=jnp.float32).astype(ep_dtype)
                   + bias1)

        # x = leaky_relu(fc2(cat((h1, action), dim=1)))
        # cat(h1, a) @ W2 == h1 @ W2[:fc1] + a @ W2[fc1:]
        acc2 = (jnp.dot(h1.astype(jnp.bfloat16), w2h_ref[...],
                        preferred_element_type=jnp.float32)
                + jnp.dot(a, w2a_ref[...],
                          preferred_element_type=jnp.float32))
        h2 = leaky(acc2.astype(ep_dtype) + bias2)

        # x = leaky_relu(fc3(x))
        h3 = leaky(jnp.dot(h2.astype(jnp.bfloat16), w3_ref[...],
                           preferred_element_type=jnp.float32).astype(ep_dtype)
                   + bias3)

        # x = fc4(x): N=1, so VPU multiply + cross-lane sum in f32 (skip MXU).
        q = (jnp.sum(h3.astype(jnp.float32) * w4_ref[...],
                     axis=-1, keepdims=True)
             + bias4)
        q_ref[...] = q.astype(q_ref.dtype)

    # Weights/biases: same whole-array block every grid step (grid-invariant,
    # stays resident in VMEM across the batch tiles).
    full2d = lambda arr: pl.BlockSpec(arr.shape, lambda i: (0, 0))

    q_pad = pl.pallas_call(
        kernel,
        out_shape=jax.ShapeDtypeStruct((B_pad, 1), jnp.float32),
        grid=(B_pad // batch_tile,),
        in_specs=[
            pl.BlockSpec((batch_tile, S), lambda i: (i, 0)),   # state tile
            pl.BlockSpec((batch_tile, A), lambda i: (i, 0)),   # action tile
            full2d(w1_bf), full2d(w2h_bf), full2d(w2a_bf), full2d(w3_bf),
            full2d(w4_row), full2d(b_all),
        ],
        out_specs=pl.BlockSpec((batch_tile, 1), lambda i: (i, 0)),
        compiler_params=pltpu.CompilerParams(
            dimension_semantics=("parallel",),
            vmem_limit_bytes=48 * 1024 * 1024),   # headroom under v7x's 64 MiB
    )(state_bf, action_bf, w1_bf, w2h_bf, w2a_bf, w3_bf, w4_row, b_all)

    return q_pad[:B]


def init_params(key, state_size, action_size, fc1=128, fc2=128, fc3=128):
    """Deterministic init in the same spirit as CriticNetwork.reset_parameters."""
    ks = jax.random.split(key, 8)

    u = lambda k, shape, lo, hi: jax.random.uniform(k, shape, jnp.float32, lo, hi)

    lim1 = 1.0 / state_size ** 0.5
    w1 = u(ks[0], (state_size, fc1), -lim1, lim1)
    b1 = u(ks[1], (1, fc1), -lim1, lim1)

    lim2 = 1.0 / (fc1 + action_size) ** 0.5
    w2 = u(ks[2], (fc1 + action_size, fc2), -lim2, lim2)
    w2h, w2a = w2[:fc1], w2[fc1:]
    b2 = u(ks[3], (1, fc2), -lim2, lim2)

    lim3 = 1.0 / fc2 ** 0.5
    w3 = u(ks[4], (fc2, fc3), -lim3, lim3)
    b3 = u(ks[5], (1, fc3), -lim3, lim3)

    w4 = u(ks[6], (fc3, 1), -0.003, 0.003)
    b4 = u(ks[7], (1, 1), -1.0 / fc3 ** 0.5, 1.0 / fc3 ** 0.5)

    return (w1, b1, w2h, w2a, b2, w3, b3, w4, b4)


def reference_forward(state, action, params):
    """Pure-JAX f32 reference matching the PyTorch forward (use_batch_norm=False)."""
    w1, b1, w2h, w2a, b2, w3, b3, w4, b4 = params
    leaky = lambda x: jnp.maximum(x, 0.01 * x)
    h1 = leaky(state @ w1 + b1)
    x = jnp.concatenate([h1, action], axis=1)
    w2 = jnp.concatenate([w2h, w2a], axis=0)
    h2 = leaky(x @ w2 + b2)
    h3 = leaky(h2 @ w3 + b3)
    return h3 @ w4 + b4


if __name__ == "__main__":
    key = jax.random.PRNGKey(0)
    k_param, k_state, k_action = jax.random.split(key, 3)

    B, STATE_SIZE, ACTION_SIZE = 16, 32, 8
    FC1 = FC2 = FC3 = 128  # scaled-down hidden sizes (module default is 512)

    params = init_params(k_param, STATE_SIZE, ACTION_SIZE, FC1, FC2, FC3)
    state = jax.random.normal(k_state, (B, STATE_SIZE), jnp.float32)
    action = jax.random.normal(k_action, (B, ACTION_SIZE), jnp.float32)

    # bf16 MXU operands (+ bf16 epilogue on v6e/v7x) -> looser tolerance vs f32.
    ATOL = RTOL = 2e-2

    # 1) Small-batch path: single grid step with the whole (padded) batch.
    q = critic_forward(state, action, params)
    jax.block_until_ready(q)
    q_ref = reference_forward(state, action, params)
    assert q.shape == (B, 1)
    assert jnp.allclose(q, q_ref, atol=ATOL, rtol=RTOL), (
        float(jnp.max(jnp.abs(q - q_ref))))

    # 2) Padded-remainder path (B not a multiple of the tile).
    B2 = 20
    state2 = jax.random.normal(jax.random.PRNGKey(1), (B2, STATE_SIZE), jnp.float32)
    action2 = jax.random.normal(jax.random.PRNGKey(2), (B2, ACTION_SIZE), jnp.float32)
    q2 = critic_forward(state2, action2, params)
    jax.block_until_ready(q2)
    q2_ref = reference_forward(state2, action2, params)
    assert q2.shape == (B2, 1)
    assert jnp.allclose(q2, q2_ref, atol=ATOL, rtol=RTOL), (
        float(jnp.max(jnp.abs(q2 - q2_ref))))

    # 3) Multi-tile grid path (explicit small tile so grid > 1 on any chip).
    B3 = 272
    state3 = jax.random.normal(jax.random.PRNGKey(3), (B3, STATE_SIZE), jnp.float32)
    action3 = jax.random.normal(jax.random.PRNGKey(4), (B3, ACTION_SIZE), jnp.float32)
    q3 = critic_forward(state3, action3, params, batch_tile=128)
    jax.block_until_ready(q3)
    q3_ref = reference_forward(state3, action3, params)
    assert q3.shape == (B3, 1)
    assert jnp.allclose(q3, q3_ref, atol=ATOL, rtol=RTOL), (
        float(jnp.max(jnp.abs(q3 - q3_ref))))

    print("KERNEL_OK")
</pallas_src>

<mosaic_0001>
module attributes {stable_mosaic.version = 11 : i64} {
  func.func @kernel(%arg0: i32, %arg1: memref<16x32xbf16, #tpu.memory_space<vmem>>, %arg2: memref<16x8xbf16, #tpu.memory_space<vmem>>, %arg3: memref<32x128xbf16, #tpu.memory_space<vmem>>, %arg4: memref<128x128xbf16, #tpu.memory_space<vmem>>, %arg5: memref<8x128xbf16, #tpu.memory_space<vmem>>, %arg6: memref<128x128xbf16, #tpu.memory_space<vmem>>, %arg7: memref<1x128xf32, #tpu.memory_space<vmem>>, %arg8: memref<1x512xf32, #tpu.memory_space<vmem>>, %arg9: memref<16x1xf32, #tpu.memory_space<vmem>>) attributes {dimension_semantics = [#tpu.dimension_semantics<parallel>], iteration_bounds = array<i64: 1>, scalar_prefetch = 0 : i64, scratch_operands = 0 : i64, tpu.core_type = #tpu.core_type<tc>, window_params = [{transform_indices = @transform_0, window_bounds = array<i64: 16, 32>}, {transform_indices = @transform_1, window_bounds = array<i64: 16, 8>}, {pipeline_mode = #tpu.pipeline_mode<synchronous>, transform_indices = @transform_2, window_bounds = array<i64: 32, 128>}, {pipeline_mode = #tpu.pipeline_mode<synchronous>, transform_indices = @transform_3, window_bounds = array<i64: 128, 128>}, {pipeline_mode = #tpu.pipeline_mode<synchronous>, transform_indices = @transform_4, window_bounds = array<i64: 8, 128>}, {pipeline_mode = #tpu.pipeline_mode<synchronous>, transform_indices = @transform_5, window_bounds = array<i64: 128, 128>}, {pipeline_mode = #tpu.pipeline_mode<synchronous>, transform_indices = @transform_6, window_bounds = array<i64: 1, 128>}, {pipeline_mode = #tpu.pipeline_mode<synchronous>, transform_indices = @transform_7, window_bounds = array<i64: 1, 512>}, {transform_indices = @transform_8, window_bounds = array<i64: 16, 1>}]} {
    %c0 = arith.constant 0 : index
    %c0_0 = arith.constant 0 : index
    %0 = vector.load %arg1[%c0, %c0_0] : memref<16x32xbf16, #tpu.memory_space<vmem>>, vector<16x32xbf16>
    %c0_1 = arith.constant 0 : index
    %c0_2 = arith.constant 0 : index
    %1 = vector.load %arg2[%c0_1, %c0_2] : memref<16x8xbf16, #tpu.memory_space<vmem>>, vector<16x8xbf16>
    %c0_3 = arith.constant 0 : index
    %c0_4 = arith.constant 0 : index
    %2 = vector.load %arg8[%c0_3, %c0_4] : memref<1x512xf32, #tpu.memory_space<vmem>>, vector<1x128xf32>
    %c0_5 = arith.constant 0 : index
    %c128 = arith.constant 128 : index
    %3 = vector.load %arg8[%c0_5, %c128] : memref<1x512xf32, #tpu.memory_space<vmem>>, vector<1x128xf32>
    %c0_6 = arith.constant 0 : index
    %c256 = arith.constant 256 : index
    %4 = vector.load %arg8[%c0_6, %c256] : memref<1x512xf32, #tpu.memory_space<vmem>>, vector<1x128xf32>
    %c0_7 = arith.constant 0 : index
    %c384 = arith.constant 384 : index
    %5 = vector.load %arg8[%c0_7, %c384] : memref<1x512xf32, #tpu.memory_space<vmem>>, vector<1x1xf32>
    %c0_8 = arith.constant 0 : index
    %c0_9 = arith.constant 0 : index
    %6 = vector.load %arg3[%c0_8, %c0_9] : memref<32x128xbf16, #tpu.memory_space<vmem>>, vector<32x128xbf16>
    %cst = arith.constant dense<0.000000e+00> : vector<16x128xf32>
    %7 = tpu.matmul %0, %6, %cst {dimension_numbers = #tpu.dot_dimension_numbers<[1], [0], [0], [1], [0, 0, 1, 1], [], []>} : vector<16x32xbf16>, vector<32x128xbf16>, vector<16x128xf32> -> vector<16x128xf32>
    %8 = vector.broadcast %2 : vector<1x128xf32> to vector<16x128xf32>
    %9 = arith.addf %7, %8 : vector<16x128xf32>
    %cst_10 = arith.constant 0.00999999977 : f32
    %10 = vector.broadcast %cst_10 : f32 to vector<16x128xf32>
    %11 = arith.mulf %10, %9 : vector<16x128xf32>
    %12 = arith.maximumf %9, %11 : vector<16x128xf32>
    %13 = arith.truncf %12 : vector<16x128xf32> to vector<16x128xbf16>
    %c0_11 = arith.constant 0 : index
    %c0_12 = arith.constant 0 : index
    %14 = vector.load %arg4[%c0_11, %c0_12] : memref<128x128xbf16, #tpu.memory_space<vmem>>, vector<128x128xbf16>
    %cst_13 = arith.constant dense<0.000000e+00> : vector<16x128xf32>
    %15 = tpu.matmul %13, %14, %cst_13 {dimension_numbers = #tpu.dot_dimension_numbers<[1], [0], [0], [1], [0, 0, 1, 1], [], []>} : vector<16x128xbf16>, vector<128x128xbf16>, vector<16x128xf32> -> vector<16x128xf32>
    %c0_14 = arith.constant 0 : index
    %c0_15 = arith.constant 0 : index
    %16 = vector.load %arg5[%c0_14, %c0_15] : memref<8x128xbf16, #tpu.memory_space<vmem>>, vector<8x128xbf16>
    %cst_16 = arith.constant dense<0.000000e+00> : vector<16x128xf32>
    %17 = tpu.matmul %1, %16, %cst_16 {dimension_numbers = #tpu.dot_dimension_numbers<[1], [0], [0], [1], [0, 0, 1, 1], [], []>} : vector<16x8xbf16>, vector<8x128xbf16>, vector<16x128xf32> -> vector<16x128xf32>
    %18 = arith.addf %15, %17 : vector<16x128xf32>
    %19 = vector.broadcast %3 : vector<1x128xf32> to vector<16x128xf32>
    %20 = arith.addf %18, %19 : vector<16x128xf32>
    %cst_17 = arith.constant 0.00999999977 : f32
    %21 = vector.broadcast %cst_17 : f32 to vector<16x128xf32>
    %22 = arith.mulf %21, %20 : vector<16x128xf32>
    %23 = arith.maximumf %20, %22 : vector<16x128xf32>
    %24 = arith.truncf %23 : vector<16x128xf32> to vector<16x128xbf16>
    %c0_18 = arith.constant 0 : index
    %c0_19 = arith.constant 0 : index
    %25 = vector.load %arg6[%c0_18, %c0_19] : memref<128x128xbf16, #tpu.memory_space<vmem>>, vector<128x128xbf16>
    %cst_20 = arith.constant dense<0.000000e+00> : vector<16x128xf32>
    %26 = tpu.matmul %24, %25, %cst_20 {dimension_numbers = #tpu.dot_dimension_numbers<[1], [0], [0], [1], [0, 0, 1, 1], [], []>} : vector<16x128xbf16>, vector<128x128xbf16>, vector<16x128xf32> -> vector<16x128xf32>
    %27 = vector.broadcast %4 : vector<1x128xf32> to vector<16x128xf32>
    %28 = arith.addf %26, %27 : vector<16x128xf32>
    %cst_21 = arith.constant 0.00999999977 : f32
    %29 = vector.broadcast %cst_21 : f32 to vector<16x128xf32>
    %30 = arith.mulf %29, %28 : vector<16x128xf32>
    %31 = arith.maximumf %28, %30 : vector<16x128xf32>
    %c0_22 = arith.constant 0 : index
    %c0_23 = arith.constant 0 : index
    %32 = vector.load %arg7[%c0_22, %c0_23] : memref<1x128xf32, #tpu.memory_space<vmem>>, vector<1x128xf32>
    %33 = vector.broadcast %32 : vector<1x128xf32> to vector<16x128xf32>
    %34 = arith.mulf %31, %33 : vector<16x128xf32>
    %cst_24 = arith.constant dense<0.000000e+00> : vector<16xf32>
    %35 = vector.multi_reduction <add>, %34, %cst_24 [1] : vector<16x128xf32> to vector<16xf32>
    %36 = vector.shape_cast %35 : vector<16xf32> to vector<16x1xf32>
    %37 = vector.broadcast %5 : vector<1x1xf32> to vector<16x1xf32>
    %38 = arith.addf %36, %37 : vector<16x1xf32>
    %c0_25 = arith.constant 0 : index
    %c0_26 = arith.constant 0 : index
    %39 = vector.load %arg9[%c0_25, %c0_26] : memref<16x1xf32, #tpu.memory_space<vmem>>, vector<16x1xf32>
    tpu.vector_store %arg9[%c0_25, %c0_26], %38 {strides = array<i32>} : memref<16x1xf32, #tpu.memory_space<vmem>>, vector<16x1xf32>,
    return
  }
  func.func @transform_0(%arg0: i32) -> (i32, i32) {
    %c0_i32 = arith.constant 0 : i32
    %c0_i32_0 = arith.constant 0 : i32
    return %arg0, %c0_i32 : i32, i32
  }
  func.func @transform_1(%arg0: i32) -> (i32, i32) {
    %c0_i32 = arith.constant 0 : i32
    %c0_i32_0 = arith.constant 0 : i32
    return %arg0, %c0_i32 : i32, i32
  }
  func.func @transform_2(%arg0: i32) -> (i32, i32) {
    %c0_i32 = arith.constant 0 : i32
    %c0_i32_0 = arith.constant 0 : i32
    %c0_i32_1 = arith.constant 0 : i32
    return %c0_i32, %c0_i32_0 : i32, i32
  }
  func.func @transform_3(%arg0: i32) -> (i32, i32) {
    %c0_i32 = arith.constant 0 : i32
    %c0_i32_0 = arith.constant 0 : i32
    %c0_i32_1 = arith.constant 0 : i32
    return %c0_i32, %c0_i32_0 : i32, i32
  }
  func.func @transform_4(%arg0: i32) -> (i32, i32) {
    %c0_i32 = arith.constant 0 : i32
    %c0_i32_0 = arith.constant 0 : i32
    %c0_i32_1 = arith.constant 0 : i32
    return %c0_i32, %c0_i32_0 : i32, i32
  }
  func.func @transform_5(%arg0: i32) -> (i32, i32) {
    %c0_i32 = arith.constant 0 : i32
    %c0_i32_0 = arith.constant 0 : i32
    %c0_i32_1 = arith.constant 0 : i32
    return %c0_i32, %c0_i32_0 : i32, i32
  }
  func.func @transform_6(%arg0: i32) -> (i32, i32) {
    %c0_i32 = arith.constant 0 : i32
    %c0_i32_0 = arith.constant 0 : i32
    %c0_i32_1 = arith.constant 0 : i32
    return %c0_i32, %c0_i32_0 : i32, i32
  }
  func.func @transform_7(%arg0: i32) -> (i32, i32) {
    %c0_i32 = arith.constant 0 : i32
    %c0_i32_0 = arith.constant 0 : i32
    %c0_i32_1 = arith.constant 0 : i32
    return %c0_i32, %c0_i32_0 : i32, i32
  }
  func.func @transform_8(%arg0: i32) -> (i32, i32) {
    %c0_i32 = arith.constant 0 : i32
    %c0_i32_0 = arith.constant 0 : i32
    return %arg0, %c0_i32 : i32, i32
  }
}

</mosaic_0001>

<llo_original>
// kernel: tpu_custom_call.1
$region0: #{tpu_custom_call.1}
  #allocation0 [shape = 'u32[]', space=smem, size = 0x4, offset = 0x4, fixed_abs, tag = 'smem constant byte address 0x4 - core index']
  #allocation1 [shape = 'u32[144,128]{1,0:T(1,128)}', space=vmem, size = 0x12000, scoped, tag = 'internal scratch']
  %s0 = inlined_call_operand.hbm [shape: bf16[16,32], index: 0, kind: input, shape index: {}]
  %s1 = inlined_call_operand.vmem [shape: bf16[16,8], index: 1, kind: input, shape index: {}]
  %s2 = inlined_call_operand.vmem [shape: bf16[32,128], index: 2, kind: input, shape index: {}]
  %s3 = inlined_call_operand.hbm [shape: bf16[128,128], index: 3, kind: input, shape index: {}]
  %s4 = inlined_call_operand.vmem [shape: bf16[8,128], index: 4, kind: input, shape index: {}]
  %s5 = inlined_call_operand.hbm [shape: bf16[128,128], index: 5, kind: input, shape index: {}]
  %s6 = inlined_call_operand.vmem [shape: f32[1,128], index: 6, kind: input, shape index: {}]
  %s7 = inlined_call_operand.vmem [shape: f32[1,512], index: 7, kind: input, shape index: {}]
  %s8 = inlined_call_operand.vmem [shape: f32[16,1], index: 8, kind: output, shape index: {}]
  %s9 = sld [smem:[#allocation0]]
  $region54: #{tpu_custom_call.1} parent=0
    _
  %s11 = ssub.s32 1, %s9
  %s12 = scalar_select 0, %s11, %s9
  $region1: #{tpu_custom_call.1} parent=0
    #allocation2 [shape = 'u8[4096]{0}', space=vmem, size = 0x1000, scoped, tag = 'input window, operand 0, single buffered']
    #allocation3 [shape = 's32[1]{0}', space=sflag, size = 0x4, scoped, tag = 'scoped memory for tpu_custom_call.1']
    #allocation4 [shape = 'u8[32768]{0}', space=vmem, size = 0x8000, scoped, tag = 'input window, operand 3, single buffered']
    #allocation5 [shape = 's32[1]{0}', space=sflag, size = 0x4, scoped, tag = 'scoped memory for tpu_custom_call.1']
    #allocation6 [shape = 'u8[32768]{0}', space=vmem, size = 0x8000, scoped, tag = 'input window, operand 5, single buffered']
    %13 = vsyncpa [#allocation3], 0
    %14 = vsyncpa [#allocation5], 0
    // Predicated region
    $region2: #{tpu_custom_call.1} parent=1 // pred_check
      _
    $region3: #{tpu_custom_call.1} parent=1 // pred_check_branch
      %16 = sbr.rel (0) target = $region5
    $region4: #{tpu_custom_call.1} parent=1 // pred_region
      %s18 = ssub.s32 128, 128
      %19 = vsyncadd [#allocation3], %s18
      %s20 = sshll.u32 [#allocation2], 4
      %s21 = int_to_ptr.vmem [resolvable:$true] %s20
      %26 = dma.hbm_to_vmem [thread:$0]  %s0, 128, %s21, [#allocation3], 64, 64, 4
    $region5: #{tpu_custom_call.1} parent=1 // pred_fallthru
      _
    // Predicated region
    $region6: #{tpu_custom_call.1} parent=1 // pred_check
      _
    $region7: #{tpu_custom_call.1} parent=1 // pred_check_branch
      %28 = sbr.rel (0) target = $region9
    $region8: #{tpu_custom_call.1} parent=1 // pred_region
      _
    $region9: #{tpu_custom_call.1} parent=1 // pred_fallthru
      _
    // Predicated region
    $region10: #{tpu_custom_call.1} parent=1 // pred_check
      _
    $region11: #{tpu_custom_call.1} parent=1 // pred_check_branch
      %30 = sbr.rel (0) target = $region13
    $region12: #{tpu_custom_call.1} parent=1 // pred_region
      _
    $region13: #{tpu_custom_call.1} parent=1 // pred_fallthru
      _
    // Predicated region
    $region14: #{tpu_custom_call.1} parent=1 // pred_check
      _
    $region15: #{tpu_custom_call.1} parent=1 // pred_check_branch
      %32 = sbr.rel (0) target = $region17
    $region16: #{tpu_custom_call.1} parent=1 // pred_region
      %s34 = ssub.s32 1024, 1024
      %35 = vsyncadd [#allocation5], %s34
      %s36 = sshll.u32 [#allocation4], 4
      %s37 = int_to_ptr.vmem [resolvable:$true] %s36
      %42 = dma.hbm_to_vmem [thread:$0]  %s3, 1024, %s37, [#allocation5], 64, 64, 4
    $region17: #{tpu_custom_call.1} parent=1 // pred_fallthru
      _
    // Predicated region
    $region18: #{tpu_custom_call.1} parent=1 // pred_check
      _
    $region19: #{tpu_custom_call.1} parent=1 // pred_check_branch
      %44 = sbr.rel (0) target = $region21
    $region20: #{tpu_custom_call.1} parent=1 // pred_region
      _
    $region21: #{tpu_custom_call.1} parent=1 // pred_fallthru
      _
    // Predicated region
    $region22: #{tpu_custom_call.1} parent=1 // pred_check
      _
    $region23: #{tpu_custom_call.1} parent=1 // pred_check_branch
      %46 = sbr.rel (0) target = $region25
    $region24: #{tpu_custom_call.1} parent=1 // pred_region
      %s48 = ssub.s32 1024, 1024
      %49 = vsyncadd [#allocation5], %s48
      %s50 = sshll.u32 [#allocation6], 4
      %s51 = int_to_ptr.vmem [resolvable:$true] %s50
      %56 = dma.hbm_to_vmem [thread:$0]  %s5, 1024, %s51, [#allocation5], 64, 64, 4
    $region25: #{tpu_custom_call.1} parent=1 // pred_fallthru
      _
    // Predicated region
    $region26: #{tpu_custom_call.1} parent=1 // pred_check
      _
    $region27: #{tpu_custom_call.1} parent=1 // pred_check_branch
      %58 = sbr.rel (0) target = $region29
    $region28: #{tpu_custom_call.1} parent=1 // pred_region
      _
    $region29: #{tpu_custom_call.1} parent=1 // pred_fallthru
      _
    // Predicated region
    $region30: #{tpu_custom_call.1} parent=1 // pred_check
      _
    $region31: #{tpu_custom_call.1} parent=1 // pred_check_branch
      %60 = sbr.rel (0) target = $region33
    $region32: #{tpu_custom_call.1} parent=1 // pred_region
      _
    $region33: #{tpu_custom_call.1} parent=1 // pred_fallthru
      _
    // Predicated region
    $region34: #{tpu_custom_call.1} parent=1 // pred_check
      _
    $region35: #{tpu_custom_call.1} parent=1 // pred_check_branch
      %62 = sbr.rel (0) target = $region37
    $region36: #{tpu_custom_call.1} parent=1 // pred_region
      %63 = dma.done [#allocation3], 128
    $region37: #{tpu_custom_call.1} parent=1 // pred_fallthru
      _
    // Predicated region
    $region38: #{tpu_custom_call.1} parent=1 // pred_check
      _
    $region39: #{tpu_custom_call.1} parent=1 // pred_check_branch
      %65 = sbr.rel (0) target = $region41
    $region40: #{tpu_custom_call.1} parent=1 // pred_region
      %66 = dma.done [#allocation5], 1024
    $region41: #{tpu_custom_call.1} parent=1 // pred_fallthru
      _
    // Predicated region
    $region42: #{tpu_custom_call.1} parent=1 // pred_check
      _
    $region43: #{tpu_custom_call.1} parent=1 // pred_check_branch
      %68 = sbr.rel (0) target = $region45
    $region44: #{tpu_custom_call.1} parent=1 // pred_region
      %69 = dma.done [#allocation5], 1024
    $region45: #{tpu_custom_call.1} parent=1 // pred_fallthru
      _
    %v71 = vld [vmem:[#allocation2] sm:$0xf]
    %v72 = vld [vmem:[#allocation2 + $0x4] sm:$0xf]
    %v73 = vld [vmem:[%s1] sm:$0xf]
    %v74 = vld [vmem:[%s1 + $0x4] sm:$0xf]
    %v75 = vld [vmem:[%s7] sm:$0x1]
    %v76 = vld [vmem:[%s7 + $0x1] sm:$0x1]
    %v77 = vld [vmem:[%s7 + $0x2] sm:$0x1]
    %v78 = vld [vmem:[%s7 + $0x3] sm:$0x1]
    %v79 = vld [vmem:[%s2] sm:$0xf]
    %v80 = vld [vmem:[%s2 + $0x4] sm:$0xf]
    %v81 = vld [vmem:[%s2 + $0x8] sm:$0xf]
    %v82 = vld [vmem:[%s2 + $0xc] sm:$0xf]
    %v84 = vlaneseq
    %v85 = vshrl.u32 %v84, 7
    %v86 = vsub.s32 0, %v85
    %v87 = vrot.slane %v75, %v86
    %v91 = vunpack.c.l.b16 %v71
    %v92 = vunpack.c.l.b16 %v72
    %v93 = vpack.c.b16 %v92, %v91
    %v98 = vunpack.c.l.b16 %v79
    %v99 = vunpack.c.l.b16 %v80
    %v100 = vunpack.c.l.b16 %v81
    %v101 = vunpack.c.l.b16 %v82
    %v102 = vpack.c.b16 %v99, %v98
    %v103 = vpack.c.b16 %v101, %v100
    %vm106 = vcmask 261120
    %v108 = vsel %vm106, %v93, 0
    %110 = vmatprep.subr.bf16.mxu0 0
    %111 = vmatpush1.bf16.msra.mxu0 %v102
    %112 = vmatprep.subr.bf16.mxu0 0
    %113 = vmatpush1.bf16.msra.mxu0 %v103
    %114 = vmatprep.subr.bf16.mxu0 0
    %115 = vmatpush1.bf16.msra.mxu0 0
    %116 = vmatprep.subr.bf16.mxu0 0
    %117 = vmatpush1.bf16.msra.mxu0 0
    %118 = vmatprep.subr.bf16.mxu0 0
    %119 = vmatpush1.bf16.msra.mxu0 0
    %120 = vmatprep.subr.bf16.mxu0 0
    %121 = vmatpush1.bf16.msra.mxu0 0
    %122 = vmatprep.subr.bf16.mxu0 0
    %123 = vmatpush1.bf16.msra.mxu0 0
    %124 = vmatprep.subr.bf16.mxu0 0
    %125 = vmatpush1.bf16.msra.mxu0 0
    %126 = vmatprep.subr.bf16.mxu0 0
    %127 = vmatpush1.bf16.msra.mxu0 0
    %128 = vmatprep.subr.bf16.mxu0 0
    %129 = vmatpush1.bf16.msra.mxu0 0
    %130 = vmatprep.subr.bf16.mxu0 0
    %131 = vmatpush1.bf16.msra.mxu0 0
    %132 = vmatprep.subr.bf16.mxu0 0
    %133 = vmatpush1.bf16.msra.mxu0 0
    %134 = vmatprep.subr.bf16.mxu0 0
    %135 = vmatpush1.bf16.msra.mxu0 0
    %136 = vmatprep.subr.bf16.mxu0 0
    %137 = vmatpush1.bf16.msra.mxu0 0
    %138 = vmatprep.subr.bf16.mxu0 0
    %139 = vmatpush1.bf16.msra.mxu0 0
    %140 = vmatprep.subr.bf16.mxu0 0
    %141 = vmatpush1.bf16.msra.mxu0 0
    %142 = vmatprep.mubr.bf16.mxu0 0
    %143 = vmatmul.mubr.bf16.gmra.mrb[0].mxu0 %v108
    %v144 = vpop.f32.mrb[0].mxu0
    %v145 = vadd.f32 %v87, %v144
    %v146 = vpop.f32.mrb[0].mxu0
    %v147 = vpop.f32.mrb[0].mxu0
    %v148 = vadd.f32 %v87, %v147
    %v149 = vpop.f32.mrb[0].mxu0
    %150 = vdwg.mxu0
    %v151 = vmul.f32 %v145, 0.01
    %v152 = vmul.f32 %v148, 0.01
    %v153 = vmax.f32 %v145, %v151
    %v154 = vmax.f32 %v148, %v152
    %v155 = vpack.c.bf16 %v154, %v153
    %v156 = vld [vmem:[#allocation4] sm:$0xf]
    %v157 = vld [vmem:[#allocation4 + $0x4] sm:$0xf]
    %v158 = vld [vmem:[#allocation4 + $0x8] sm:$0xf]
    %v159 = vld [vmem:[#allocation4 + $0xc] sm:$0xf]
    %v160 = vld [vmem:[#allocation4 + $0x10] sm:$0xf]
    %v161 = vld [vmem:[#allocation4 + $0x14] sm:$0xf]
    %v162 = vld [vmem:[#allocation4 + $0x18] sm:$0xf]
    %v163 = vld [vmem:[#allocation4 + $0x1c] sm:$0xf]
    %v164 = vld [vmem:[#allocation4 + $0x20] sm:$0xf]
    %v165 = vld [vmem:[#allocation4 + $0x24] sm:$0xf]
    %v166 = vld [vmem:[#allocation4 + $0x28] sm:$0xf]
    %v167 = vld [vmem:[#allocation4 + $0x2c] sm:$0xf]
    %v168 = vld [vmem:[#allocation4 + $0x30] sm:$0xf]
    %v169 = vld [vmem:[#allocation4 + $0x34] sm:$0xf]
    %v170 = vld [vmem:[#allocation4 + $0x38] sm:$0xf]
    %v171 = vld [vmem:[#allocation4 + $0x3c] sm:$0xf]
    %v172 = vld [vmem:[%s4] sm:$0xf]
    %v175 = vunpack.c.l.b16 %v73
    %v176 = vunpack.c.l.b16 %v74
    %v177 = vpack.c.b16 %v176, %v175
    %vm178 = vcmask 64512
    %v180 = vsel %vm178, %v177, 0
    %vm182 = vcmask 1043456
    %v184 = vsel %vm182, %v172, 0
    %186 = vmatprep.subr.bf16.mxu0 0
    %187 = vmatpush1.bf16.msra.mxu0 %v184
    %188 = vmatprep.subr.bf16.mxu0 0
    %189 = vmatpush1.bf16.msra.mxu0 0
    %190 = vmatprep.subr.bf16.mxu0 0
    %191 = vmatpush1.bf16.msra.mxu0 0
    %192 = vmatprep.subr.bf16.mxu0 0
    %193 = vmatpush1.bf16.msra.mxu0 0
    %194 = vmatprep.subr.bf16.mxu0 0
    %195 = vmatpush1.bf16.msra.mxu0 0
    %196 = vmatprep.subr.bf16.mxu0 0
    %197 = vmatpush1.bf16.msra.mxu0 0
    %198 = vmatprep.subr.bf16.mxu0 0
    %199 = vmatpush1.bf16.msra.mxu0 0
    %200 = vmatprep.subr.bf16.mxu0 0
    %201 = vmatpush1.bf16.msra.mxu0 0
    %202 = vmatprep.subr.bf16.mxu0 0
    %203 = vmatpush1.bf16.msra.mxu0 0
    %204 = vmatprep.subr.bf16.mxu0 0
    %205 = vmatpush1.bf16.msra.mxu0 0
    %206 = vmatprep.subr.bf16.mxu0 0
    %207 = vmatpush1.bf16.msra.mxu0 0
    %208 = vmatprep.subr.bf16.mxu0 0
    %209 = vmatpush1.bf16.msra.mxu0 0
    %210 = vmatprep.subr.bf16.mxu0 0
    %211 = vmatpush1.bf16.msra.mxu0 0
    %212 = vmatprep.subr.bf16.mxu0 0
    %213 = vmatpush1.bf16.msra.mxu0 0
    %214 = vmatprep.subr.bf16.mxu0 0
    %215 = vmatpush1.bf16.msra.mxu0 0
    %216 = vmatprep.subr.bf16.mxu0 0
    %217 = vmatpush1.bf16.msra.mxu0 0
    %218 = vmatprep.mubr.bf16.mxu0 0
    %219 = vmatmul.mubr.bf16.gmra.mrb[0].mxu0 %v180
    %v220 = vpop.f32.mrb[0].mxu0
    %v221 = vadd.f32 0.0, %v220
    %v222 = vpop.f32.mrb[0].mxu0
    %v223 = vpop.f32.mrb[0].mxu0
    %v224 = vadd.f32 0.0, %v223
    %v225 = vpop.f32.mrb[0].mxu0
    %226 = vdwg.mxu0
    %v243 = vunpack.c.l.b16 %v156
    %v244 = vunpack.c.l.b16 %v157
    %v245 = vunpack.c.l.b16 %v158
    %v246 = vunpack.c.l.b16 %v159
    %v247 = vunpack.c.l.b16 %v160
    %v248 = vunpack.c.l.b16 %v161
    %v249 = vunpack.c.l.b16 %v162
    %v250 = vunpack.c.l.b16 %v163
    %v251 = vunpack.c.l.b16 %v164
    %v252 = vunpack.c.l.b16 %v165
    %v253 = vunpack.c.l.b16 %v166
    %v254 = vunpack.c.l.b16 %v167
    %v255 = vunpack.c.l.b16 %v168
    %v256 = vunpack.c.l.b16 %v169
    %v257 = vunpack.c.l.b16 %v170
    %v258 = vunpack.c.l.b16 %v171
    %v259 = vpack.c.b16 %v244, %v243
    %v260 = vpack.c.b16 %v246, %v245
    %v261 = vpack.c.b16 %v248, %v247
    %v262 = vpack.c.b16 %v250, %v249
    %v263 = vpack.c.b16 %v252, %v251
    %v264 = vpack.c.b16 %v254, %v253
    %v265 = vpack.c.b16 %v256, %v255
    %v266 = vpack.c.b16 %v258, %v257
    %275 = vmatprep.subr.bf16.mxu0 0
    %276 = vmatpush1.bf16.msra.mxu0 %v259
    %277 = vmatprep.subr.bf16.mxu0 0
    %278 = vmatpush1.bf16.msra.mxu0 %v260
    %279 = vmatprep.subr.bf16.mxu0 0
    %280 = vmatpush1.bf16.msra.mxu0 %v261
    %281 = vmatprep.subr.bf16.mxu0 0
    %282 = vmatpush1.bf16.msra.mxu0 %v262
    %283 = vmatprep.subr.bf16.mxu0 0
    %284 = vmatpush1.bf16.msra.mxu0 %v263
    %285 = vmatprep.subr.bf16.mxu0 0
    %286 = vmatpush1.bf16.msra.mxu0 %v264
    %287 = vmatprep.subr.bf16.mxu0 0
    %288 = vmatpush1.bf16.msra.mxu0 %v265
    %289 = vmatprep.subr.bf16.mxu0 0
    %290 = vmatpush1.bf16.msra.mxu0 %v266
    %291 = vmatprep.subr.bf16.mxu0 0
    %292 = vmatpush1.bf16.msra.mxu0 0
    %293 = vmatprep.subr.bf16.mxu0 0
    %294 = vmatpush1.bf16.msra.mxu0 0
    %295 = vmatprep.subr.bf16.mxu0 0
    %296 = vmatpush1.bf16.msra.mxu0 0
    %297 = vmatprep.subr.bf16.mxu0 0
    %298 = vmatpush1.bf16.msra.mxu0 0
    %299 = vmatprep.subr.bf16.mxu0 0
    %300 = vmatpush1.bf16.msra.mxu0 0
    %301 = vmatprep.subr.bf16.mxu0 0
    %302 = vmatpush1.bf16.msra.mxu0 0
    %303 = vmatprep.subr.bf16.mxu0 0
    %304 = vmatpush1.bf16.msra.mxu0 0
    %305 = vmatprep.subr.bf16.mxu0 0
    %306 = vmatpush1.bf16.msra.mxu0 0
    %307 = vmatprep.mubr.bf16.mxu0 0
    %308 = vmatmul.mubr.bf16.gmra.mrb[0].mxu0 %v155
    %v309 = vpop.f32.mrb[0].mxu0
    %v310 = vadd.f32 %v221, %v309
    %v311 = vpop.f32.mrb[0].mxu0
    %v312 = vpop.f32.mrb[0].mxu0
    %v313 = vadd.f32 %v224, %v312
    %v314 = vpop.f32.mrb[0].mxu0
    %315 = vdwg.mxu0
    %v317 = vlaneseq
    %v318 = vshrl.u32 %v317, 7
    %v319 = vsub.s32 0, %v318
    %v320 = vrot.slane %v76, %v319
    %v322 = vadd.f32 %v310, %v320
    %v323 = vadd.f32 %v313, %v320
    %v324 = vmul.f32 %v322, 0.01
    %v325 = vmul.f32 %v323, 0.01
    %v326 = vmax.f32 %v322, %v324
    %v327 = vmax.f32 %v323, %v325
    %v328 = vpack.c.bf16 %v327, %v326
    %v329 = vld [vmem:[#allocation6] sm:$0xf]
    %v330 = vld [vmem:[#allocation6 + $0x4] sm:$0xf]
    %v331 = vld [vmem:[#allocation6 + $0x8] sm:$0xf]
    %v332 = vld [vmem:[#allocation6 + $0xc] sm:$0xf]
    %v333 = vld [vmem:[#allocation6 + $0x10] sm:$0xf]
    %v334 = vld [vmem:[#allocation6 + $0x14] sm:$0xf]
    %v335 = vld [vmem:[#allocation6 + $0x18] sm:$0xf]
    %v336 = vld [vmem:[#allocation6 + $0x1c] sm:$0xf]
    %v337 = vld [vmem:[#allocation6 + $0x20] sm:$0xf]
    %v338 = vld [vmem:[#allocation6 + $0x24] sm:$0xf]
    %v339 = vld [vmem:[#allocation6 + $0x28] sm:$0xf]
    %v340 = vld [vmem:[#allocation6 + $0x2c] sm:$0xf]
    %v341 = vld [vmem:[#allocation6 + $0x30] sm:$0xf]
    %v342 = vld [vmem:[#allocation6 + $0x34] sm:$0xf]
    %v343 = vld [vmem:[#allocation6 + $0x38] sm:$0xf]
    %v344 = vld [vmem:[#allocation6 + $0x3c] sm:$0xf]
    %v346 = vlaneseq
    %v347 = vshrl.u32 %v346, 7
    %v348 = vsub.s32 0, %v347
    %v349 = vrot.slane %v77, %v348
    %v367 = vunpack.c.l.b16 %v329
    %v368 = vunpack.c.l.b16 %v330
    %v369 = vunpack.c.l.b16 %v331
    %v370 = vunpack.c.l.b16 %v332
    %v371 = vunpack.c.l.b16 %v333
    %v372 = vunpack.c.l.b16 %v334
    %v373 = vunpack.c.l.b16 %v335
    %v374 = vunpack.c.l.b16 %v336
    %v375 = vunpack.c.l.b16 %v337
    %v376 = vunpack.c.l.b16 %v338
    %v377 = vunpack.c.l.b16 %v339
    %v378 = vunpack.c.l.b16 %v340
    %v379 = vunpack.c.l.b16 %v341
    %v380 = vunpack.c.l.b16 %v342
    %v381 = vunpack.c.l.b16 %v343
    %v382 = vunpack.c.l.b16 %v344
    %v383 = vpack.c.b16 %v368, %v367
    %v384 = vpack.c.b16 %v370, %v369
    %v385 = vpack.c.b16 %v372, %v371
    %v386 = vpack.c.b16 %v374, %v373
    %v387 = vpack.c.b16 %v376, %v375
    %v388 = vpack.c.b16 %v378, %v377
    %v389 = vpack.c.b16 %v380, %v379
    %v390 = vpack.c.b16 %v382, %v381
    %399 = vmatprep.subr.bf16.mxu0 0
    %400 = vmatpush1.bf16.msra.mxu0 %v383
    %401 = vmatprep.subr.bf16.mxu0 0
    %402 = vmatpush1.bf16.msra.mxu0 %v384
    %403 = vmatprep.subr.bf16.mxu0 0
    %404 = vmatpush1.bf16.msra.mxu0 %v385
    %405 = vmatprep.subr.bf16.mxu0 0
    %406 = vmatpush1.bf16.msra.mxu0 %v386
    %407 = vmatprep.subr.bf16.mxu0 0
    %408 = vmatpush1.bf16.msra.mxu0 %v387
    %409 = vmatprep.subr.bf16.mxu0 0
    %410 = vmatpush1.bf16.msra.mxu0 %v388
    %411 = vmatprep.subr.bf16.mxu0 0
    %412 = vmatpush1.bf16.msra.mxu0 %v389
    %413 = vmatprep.subr.bf16.mxu0 0
    %414 = vmatpush1.bf16.msra.mxu0 %v390
    %415 = vmatprep.subr.bf16.mxu0 0
    %416 = vmatpush1.bf16.msra.mxu0 0
    %417 = vmatprep.subr.bf16.mxu0 0
    %418 = vmatpush1.bf16.msra.mxu0 0
    %419 = vmatprep.subr.bf16.mxu0 0
    %420 = vmatpush1.bf16.msra.mxu0 0
    %421 = vmatprep.subr.bf16.mxu0 0
    %422 = vmatpush1.bf16.msra.mxu0 0
    %423 = vmatprep.subr.bf16.mxu0 0
    %424 = vmatpush1.bf16.msra.mxu0 0
    %425 = vmatprep.subr.bf16.mxu0 0
    %426 = vmatpush1.bf16.msra.mxu0 0
    %427 = vmatprep.subr.bf16.mxu0 0
    %428 = vmatpush1.bf16.msra.mxu0 0
    %429 = vmatprep.subr.bf16.mxu0 0
    %430 = vmatpush1.bf16.msra.mxu0 0
    %431 = vmatprep.mubr.bf16.mxu0 0
    %432 = vmatmul.mubr.bf16.gmra.mrb[0].mxu0 %v328
    %v433 = vpop.f32.mrb[0].mxu0
    %v434 = vadd.f32 %v349, %v433
    %v435 = vpop.f32.mrb[0].mxu0
    %v436 = vpop.f32.mrb[0].mxu0
    %v437 = vadd.f32 %v349, %v436
    %v438 = vpop.f32.mrb[0].mxu0
    %439 = vdwg.mxu0
    %v440 = vmul.f32 %v434, 0.01
    %v441 = vmul.f32 %v437, 0.01
    %v442 = vmax.f32 %v434, %v440
    %v443 = vmax.f32 %v437, %v441
    %v444 = vld [vmem:[%s6] sm:$0x1]
    %v446 = vlaneseq
    %v447 = vshrl.u32 %v446, 7
    %v448 = vsub.s32 0, %v447
    %v449 = vrot.slane %v444, %v448
    %v451 = vmul.f32 %v442, %v449
    %v452 = vmul.f32 %v443, %v449
    %453 = vadd.xlane.f32.xlu0 %v451
    %v454 = vpop.xlane.xlu0 %453
    %455 = vadd.xlane.f32.xlu0 %v452
    %v456 = vpop.xlane.xlu0 %455
    %v458 = vlaneseq
    %v459 = vshrl.u32 %v458, 7
    %v460 = vsub.s32 0, %v459
    %v461 = vrot.slane %v78, %v460
    %v463 = vadd.f32 %v454, %v461
    %v464 = vadd.f32 %v456, %v461
    %vm465 = vcmask 7168
    %466 = vst.msk [vmem:[%s8] sm:$0xff] %vm465, %v463
    %467 = vst.msk [vmem:[%s8 + $0x8] sm:$0xff] %vm465, %v464
    // Predicated region
    $region46: #{tpu_custom_call.1} parent=1 // pred_check
      _
    $region47: #{tpu_custom_call.1} parent=1 // pred_check_branch
      %469 = sbr.rel (0) target = $region49
    $region48: #{tpu_custom_call.1} parent=1 // pred_region
      _
    $region49: #{tpu_custom_call.1} parent=1 // pred_fallthru
      _
    // Predicated region
    $region50: #{tpu_custom_call.1} parent=1 // pred_check
      _
    $region51: #{tpu_custom_call.1} parent=1 // pred_check_branch
      %471 = sbr.rel (0) target = $region53
    $region52: #{tpu_custom_call.1} parent=1 // pred_region
      _
    $region53: #{tpu_custom_call.1} parent=1 // pred_fallthru
      _
    %472 = vsyncpa [#allocation3], 1
    %473 = vsyncpa [#allocation5], 1

</llo_original>
